<compile_context>
chip_gen: v5e
topology: v5e:2x2
jax: 0.10.0
libtpu: 0.0.40
codegen_flags: <defaults>
</compile_context>

<pallas_src>
import functools
import math

import jax
import jax.numpy as jnp
from jax.experimental import pallas as pl
from jax.experimental.pallas import tpu as pltpu

LN_EPS = 1e-5
NEG_INF = -1e30


def _vmem_limit_bytes():
    """Generation-aware scoped-VMEM limit: ~70% of physical, capped at 100 MiB."""
    try:
        cap = int(pltpu.get_tpu_info().vmem_capacity_bytes)
        return min(int(cap * 0.7), 100 * 1024 * 1024)
    except Exception:
        # Conservative fallback that fits v7x's 64 MiB physical VMEM.
        return 40 * 1024 * 1024


VMEM_LIMIT = _vmem_limit_bytes()


def _pick_tile(n, pref, align=8):
    """Largest divisor of n that is <= pref and a multiple of `align`,
    falling back to the full dimension (always legal for BlockSpec)."""
    t = min(pref, n)
    for cand in range(t, 0, -1):
        if n % cand == 0 and (cand % align == 0 or cand == n):
            return cand
    return n


def _layernorm(h, w, b):
    """Two-pass (subtract-mean) LayerNorm for better numerical stability."""
    mu = jnp.mean(h, axis=-1, keepdims=True)
    d = h - mu
    var = jnp.mean(d * d, axis=-1, keepdims=True)
    return d * jax.lax.rsqrt(var + LN_EPS) * w + b


# ---------------------------------------------------------------------------
# Kernel 1: LN1 + fused QKV projection, head split done on the VMEM tile
# ---------------------------------------------------------------------------
def _qkv_kernel(H, DpH, x_ref, ln1w_ref, ln1b_ref, wqkv_ref,
                q_ref, k_ref, v_ref):
    D = H * DpH
    h = _layernorm(x_ref[0], ln1w_ref[...], ln1b_ref[...]).astype(jnp.bfloat16)
    qkv = jnp.dot(h, wqkv_ref[...], preferred_element_type=jnp.float32)
    # Per-head static lane slices -> (B, H, S, DpH) outputs; no XLA transpose.
    for hd in range(H):
        q_ref[0, hd] = qkv[:, hd * DpH:(hd + 1) * DpH].astype(jnp.bfloat16)
        k_ref[0, hd] = qkv[:, D + hd * DpH:D + (hd + 1) * DpH].astype(jnp.bfloat16)
        v_ref[0, hd] = qkv[:, 2 * D + hd * DpH:2 * D + (hd + 1) * DpH].astype(jnp.bfloat16)


def qkv_proj(x, ln1_w, ln1_b, w_qkv, H):
    """x: (B, S, D) f32 -> q, k, v each (B, H, S, DpH) bf16."""
    B, S, D = x.shape
    DpH = D // H
    TS = _pick_tile(S, 256)
    out_sd = jax.ShapeDtypeStruct((B, H, S, DpH), jnp.bfloat16)
    return pl.pallas_call(
        functools.partial(_qkv_kernel, H, DpH),
        out_shape=(out_sd, out_sd, out_sd),
        grid=(S // TS, B),
        in_specs=[
            pl.BlockSpec((1, TS, D), lambda si, b: (b, si, 0)),
            pl.BlockSpec((1, D), lambda si, b: (0, 0)),
            pl.BlockSpec((1, D), lambda si, b: (0, 0)),
            pl.BlockSpec((D, 3 * D), lambda si, b: (0, 0)),
        ],
        out_specs=(
            pl.BlockSpec((1, H, TS, DpH), lambda si, b: (b, 0, si, 0)),
            pl.BlockSpec((1, H, TS, DpH), lambda si, b: (b, 0, si, 0)),
            pl.BlockSpec((1, H, TS, DpH), lambda si, b: (b, 0, si, 0)),
        ),
        compiler_params=pltpu.CompilerParams(
            dimension_semantics=("parallel", "parallel"),
            vmem_limit_bytes=VMEM_LIMIT),
    )(x, ln1_w, ln1_b, w_qkv)


# ---------------------------------------------------------------------------
# Kernel 2: flash-style causal attention, heads batched per grid step.
# Output written directly as (B, S, D) bf16 (no XLA merge transpose).
# ---------------------------------------------------------------------------
def _attn_kernel(TQ, TK, H, DpH, q_ref, k_ref, v_ref, o_ref,
                 m_sc, l_sc, acc_sc):
    qi = pl.program_id(0)
    kj = pl.program_id(2)

    @pl.when(kj == 0)
    def _init():
        m_sc[...] = jnp.full_like(m_sc, NEG_INF)
        l_sc[...] = jnp.zeros_like(l_sc)
        acc_sc[...] = jnp.zeros_like(acc_sc)

    def update(apply_mask):
        q = q_ref[0]  # (H, TQ, DpH) bf16, 1/sqrt(DpH) folded into Wq
        k = k_ref[0]  # (H, TK, DpH)
        v = v_ref[0]  # (H, TK, DpH)
        s = jnp.einsum('hqd,hkd->hqk', q, k,
                       preferred_element_type=jnp.float32)       # (H, TQ, TK)
        if apply_mask:
            row = qi * TQ + jax.lax.broadcasted_iota(jnp.int32, (1, TQ, TK), 1)
            col = kj * TK + jax.lax.broadcasted_iota(jnp.int32, (1, TQ, TK), 2)
            s = jnp.where(col <= row, s, NEG_INF)
        m_prev = m_sc[...]                                        # (H, TQ, 1)
        m_new = jnp.maximum(m_prev, jnp.max(s, axis=-1, keepdims=True))
        alpha = jnp.exp(m_prev - m_new)
        p = jnp.exp(s - m_new)
        # TODO(synk): attention dropout omitted (eval-mode identity).
        l_sc[...] = alpha * l_sc[...] + jnp.sum(p, axis=-1, keepdims=True)
        acc_sc[...] = alpha * acc_sc[...] + jnp.einsum(
            'hqk,hkd->hqd', p.astype(jnp.bfloat16), v,
            preferred_element_type=jnp.float32)
        m_sc[...] = m_new

    is_future = kj * TK >= (qi + 1) * TQ            # block entirely in the future
    is_past = (kj + 1) * TK - 1 <= qi * TQ          # block entirely in the past

    @pl.when(jnp.logical_and(jnp.logical_not(is_future),
                             jnp.logical_not(is_past)))
    def _diagonal():
        update(apply_mask=True)

    @pl.when(is_past)
    def _interior():
        update(apply_mask=False)

    @pl.when(kj == pl.num_programs(2) - 1)
    def _finalize():
        o = acc_sc[...] / l_sc[...]                 # exact softmax normalization
        for hd in range(H):
            o_ref[0, :, hd * DpH:(hd + 1) * DpH] = o[hd].astype(o_ref.dtype)


def attention(q, k, v):
    """q/k/v: (B, H, S, DpH) bf16 -> attention output (B, S, D) bf16."""
    B, H, S, DpH = q.shape
    D = H * DpH
    TQ = _pick_tile(S, 256)
    TK = _pick_tile(S, 256)
    nq, nk = S // TQ, S // TK

    def kv_map(qi, b, kj):
        # Clamp to the last causally-needed KV block for this Q tile so that
        # skipped steps keep the same block index (no new DMA).
        kmax = ((qi + 1) * TQ - 1) // TK
        return (b, 0, jnp.minimum(kj, kmax), 0)

    return pl.pallas_call(
        functools.partial(_attn_kernel, TQ, TK, H, DpH),
        out_shape=jax.ShapeDtypeStruct((B, S, D), jnp.bfloat16),
        grid=(nq, B, nk),
        in_specs=[
            pl.BlockSpec((1, H, TQ, DpH), lambda qi, b, kj: (b, 0, qi, 0)),
            pl.BlockSpec((1, H, TK, DpH), kv_map),
            pl.BlockSpec((1, H, TK, DpH), kv_map),
        ],
        out_specs=pl.BlockSpec((1, TQ, D), lambda qi, b, kj: (b, qi, 0)),
        scratch_shapes=[
            pltpu.VMEM((H, TQ, 1), jnp.float32),
            pltpu.VMEM((H, TQ, 1), jnp.float32),
            pltpu.VMEM((H, TQ, DpH), jnp.float32),
        ],
        compiler_params=pltpu.CompilerParams(
            dimension_semantics=("parallel", "parallel", "arbitrary"),
            vmem_limit_bytes=VMEM_LIMIT),
    )(q, k, v)


# ---------------------------------------------------------------------------
# Kernel 3: fused (att + x) residual + LN2 + MLP + residual.
# TF is sized from the VMEM budget: weights fully resident when they fit.
# ---------------------------------------------------------------------------
def _mlp_kernel(att_ref, x_ref, ln2w_ref, ln2b_ref, w1_ref, b1_ref,
                w2_ref, b2_ref, o_ref, h2_sc, acc_sc):
    fj = pl.program_id(1)

    @pl.when(fj == 0)
    def _init():
        x1 = att_ref[...].astype(jnp.float32) + x_ref[...]
        h2_sc[...] = _layernorm(x1, ln2w_ref[...], ln2b_ref[...]).astype(jnp.bfloat16)
        acc_sc[...] = jnp.zeros_like(acc_sc)

    f = jnp.dot(h2_sc[...], w1_ref[...],
                preferred_element_type=jnp.float32) + b1_ref[...]
    f = jnp.maximum(f, 0.0)
    acc_sc[...] += jnp.dot(f.astype(jnp.bfloat16), w2_ref[...],
                           preferred_element_type=jnp.float32)

    @pl.when(fj == pl.num_programs(1) - 1)
    def _finalize():
        # TODO(synk): MLP dropout omitted (eval-mode identity).
        x1 = att_ref[...].astype(jnp.float32) + x_ref[...]
        o_ref[...] = acc_sc[...] + b2_ref[...] + x1


def mlp(att_flat, x_flat, ln2_w, ln2_b, w1, b1, w2, b2):
    N, D = x_flat.shape
    F = w1.shape[1]
    # Double-buffered W1+W2 tiles use ~8*D*TF bytes; keep them under ~half the limit.
    tf_cap = max(128, int(VMEM_LIMIT // (16 * D)))
    TF = _pick_tile(F, min(F, tf_cap), align=128)
    TN = _pick_tile(N, 256 if TF == F else 512)
    return pl.pallas_call(
        _mlp_kernel,
        out_shape=jax.ShapeDtypeStruct((N, D), jnp.float32),
        grid=(N // TN, F // TF),
        in_specs=[
            pl.BlockSpec((TN, D), lambda n, f: (n, 0)),   # attention out (bf16)
            pl.BlockSpec((TN, D), lambda n, f: (n, 0)),   # residual x (f32)
            pl.BlockSpec((1, D), lambda n, f: (0, 0)),
            pl.BlockSpec((1, D), lambda n, f: (0, 0)),
            pl.BlockSpec((D, TF), lambda n, f: (0, f)),
            pl.BlockSpec((1, TF), lambda n, f: (0, f)),
            pl.BlockSpec((TF, D), lambda n, f: (f, 0)),
            pl.BlockSpec((1, D), lambda n, f: (0, 0)),
        ],
        out_specs=pl.BlockSpec((TN, D), lambda n, f: (n, 0)),
        scratch_shapes=[
            pltpu.VMEM((TN, D), jnp.bfloat16),   # LN2'd activations
            pltpu.VMEM((TN, D), jnp.float32),    # f32 accumulator
        ],
        compiler_params=pltpu.CompilerParams(
            dimension_semantics=("parallel", "arbitrary"),
            vmem_limit_bytes=VMEM_LIMIT),
    )(att_flat, x_flat, ln2_w, ln2_b, w1, b1, w2, b2)


# ---------------------------------------------------------------------------
# Kernel 4: final LN + LM head; LN3 hoisted out of the vocab loop.
# ---------------------------------------------------------------------------
def _lm_head_kernel(x_ref, ln3w_ref, ln3b_ref, wout_ref, o_ref, h_sc):
    vj = pl.program_id(1)

    @pl.when(vj == 0)
    def _ln():
        h_sc[...] = _layernorm(x_ref[...], ln3w_ref[...],
                               ln3b_ref[...]).astype(jnp.bfloat16)

    o_ref[...] = jnp.dot(h_sc[...], wout_ref[...],
                         preferred_element_type=jnp.float32)


def lm_head(x_flat, ln3_w, ln3_b, w_out):
    N, D = x_flat.shape
    V = w_out.shape[1]
    TN = _pick_tile(N, 512)
    TV = _pick_tile(V, 2048, align=128)
    return pl.pallas_call(
        _lm_head_kernel,
        out_shape=jax.ShapeDtypeStruct((N, V), jnp.float32),
        grid=(N // TN, V // TV),
        in_specs=[
            pl.BlockSpec((TN, D), lambda n, v: (n, 0)),
            pl.BlockSpec((1, D), lambda n, v: (0, 0)),
            pl.BlockSpec((1, D), lambda n, v: (0, 0)),
            pl.BlockSpec((D, TV), lambda n, v: (0, v)),
        ],
        out_specs=pl.BlockSpec((TN, TV), lambda n, v: (n, v)),
        scratch_shapes=[pltpu.VMEM((TN, D), jnp.bfloat16)],
        compiler_params=pltpu.CompilerParams(
            dimension_semantics=("parallel", "arbitrary"),
            vmem_limit_bytes=VMEM_LIMIT),
    )(x_flat, ln3_w, ln3_b, w_out)


# ---------------------------------------------------------------------------
# Parameters & forward pass
# ---------------------------------------------------------------------------
def init_params(key, L, D, H, S, V):
    """Matches GPT._init_weights: linear/embedding ~ N(0, 0.02), LN = (1, 0),
    biases zero. Matmul weights stored bf16 as (D_in, D_out)."""
    DpH = D // H
    scale = 1.0 / math.sqrt(DpH)
    keys = jax.random.split(key, 4 + 6 * L)
    params = {
        "voc_emb": 0.02 * jax.random.normal(keys[0], (V, D), jnp.float32),
        "pos_emb": 0.02 * jax.random.normal(keys[1], (S, D), jnp.float32),
        "ln3_w": jnp.ones((1, D), jnp.float32),
        "ln3_b": jnp.zeros((1, D), jnp.float32),
        "w_out": (0.02 * jax.random.normal(keys[2], (D, V), jnp.float32)
                  ).astype(jnp.bfloat16),
        "blocks": [],
    }
    for li in range(L):
        bk = jax.random.split(keys[4 + li], 6)
        wq = 0.02 * jax.random.normal(bk[0], (D, D), jnp.float32)
        wk = 0.02 * jax.random.normal(bk[1], (D, D), jnp.float32)
        wv = 0.02 * jax.random.normal(bk[2], (D, D), jnp.float32)
        # Fused QKV weight; 1/sqrt(DpH) folded into the Q portion.
        w_qkv = jnp.concatenate([wq * scale, wk, wv], axis=1).astype(jnp.bfloat16)
        params["blocks"].append({
            "ln1_w": jnp.ones((1, D), jnp.float32),
            "ln1_b": jnp.zeros((1, D), jnp.float32),
            "w_qkv": w_qkv,
            "ln2_w": jnp.ones((1, D), jnp.float32),
            "ln2_b": jnp.zeros((1, D), jnp.float32),
            "w1": (0.02 * jax.random.normal(bk[3], (D, 4 * D), jnp.float32)
                   ).astype(jnp.bfloat16),
            "b1": jnp.zeros((1, 4 * D), jnp.float32),
            "w2": (0.02 * jax.random.normal(bk[4], (4 * D, D), jnp.float32)
                   ).astype(jnp.bfloat16),
            "b2": jnp.zeros((1, D), jnp.float32),
        })
    return params


def gpt_block(x, p, H):
    B, S, D = x.shape

    # LN1 + fused QKV projection; outputs already in (B, H, S, DpH).
    q, k, v = qkv_proj(x, p["ln1_w"], p["ln1_b"], p["w_qkv"], H)

    # Flash attention; output comes back as (B, S, D) bf16, no XLA transpose.
    att = attention(q, k, v)

    # Fused residual + LN2 + MLP + residual.
    y = mlp(att.reshape(B * S, D), x.reshape(B * S, D),
            p["ln2_w"], p["ln2_b"], p["w1"], p["b1"], p["w2"], p["b2"])
    return y.reshape(B, S, D)


def gpt_forward(tokens, params, H):
    """tokens: (B, S) int32 -> logits (B, S, V)."""
    B, S = tokens.shape
    D = params["voc_emb"].shape[1]

    tok = jnp.take(params["voc_emb"], tokens, axis=0)   # (B, S, D)
    pos = params["pos_emb"][:S][None, :, :]             # (1, S, D)
    x = tok + pos
    # TODO(synk): embedding dropout omitted (eval-mode identity).

    for blk in params["blocks"]:
        x = gpt_block(x, blk, H)

    logits = lm_head(x.reshape(B * S, D),
                     params["ln3_w"], params["ln3_b"], params["w_out"])
    return logits.reshape(B, S, -1)


if __name__ == "__main__":
    # Small shapes consistent with the module: L layers, hidden D, H heads,
    # seq S, vocab V, batch B.
    L, D, H, S, V, B = 2, 32, 4, 8, 64, 2

    key = jax.random.PRNGKey(0)
    pkey, xkey = jax.random.split(key)
    params = init_params(pkey, L, D, H, S, V)
    tokens = jax.random.randint(xkey, (B, S), 0, V, dtype=jnp.int32)

    logits = gpt_forward(tokens, params, H)
    logits = jax.block_until_ready(logits)

    assert logits.shape == (B, S, V), logits.shape
    assert jnp.all(jnp.isfinite(logits))
    print("KERNEL_OK")
</pallas_src>

<mosaic_0001>
module attributes {stable_mosaic.version = 11 : i64} {
  func.func @_qkv_kernel(%arg0: i32, %arg1: i32, %arg2: memref<1x8x32xf32, #tpu.memory_space<vmem>>, %arg3: memref<1x32xf32, #tpu.memory_space<vmem>>, %arg4: memref<1x32xf32, #tpu.memory_space<vmem>>, %arg5: memref<32x96xbf16, #tpu.memory_space<vmem>>, %arg6: memref<1x4x8x8xbf16, #tpu.memory_space<vmem>>, %arg7: memref<1x4x8x8xbf16, #tpu.memory_space<vmem>>, %arg8: memref<1x4x8x8xbf16, #tpu.memory_space<vmem>>) attributes {dimension_semantics = [#tpu.dimension_semantics<parallel>, #tpu.dimension_semantics<parallel>], iteration_bounds = array<i64: 1, 2>, scalar_prefetch = 0 : i64, scratch_operands = 0 : i64, tpu.core_type = #tpu.core_type<tc>, window_params = [{transform_indices = @transform_0, window_bounds = array<i64: 1, 8, 32>}, {pipeline_mode = #tpu.pipeline_mode<synchronous>, transform_indices = @transform_1, window_bounds = array<i64: 1, 32>}, {pipeline_mode = #tpu.pipeline_mode<synchronous>, transform_indices = @transform_2, window_bounds = array<i64: 1, 32>}, {pipeline_mode = #tpu.pipeline_mode<synchronous>, transform_indices = @transform_3, window_bounds = array<i64: 32, 96>}, {transform_indices = @transform_4, window_bounds = array<i64: 1, 4, 8, 8>}, {transform_indices = @transform_5, window_bounds = array<i64: 1, 4, 8, 8>}, {transform_indices = @transform_6, window_bounds = array<i64: 1, 4, 8, 8>}]} {
    %c0 = arith.constant 0 : index
    %c0_0 = arith.constant 0 : index
    %c0_1 = arith.constant 0 : index
    %0 = vector.load %arg2[%c0, %c0_0, %c0_1] : memref<1x8x32xf32, #tpu.memory_space<vmem>>, vector<1x8x32xf32>
    %1 = vector.shape_cast %0 : vector<1x8x32xf32> to vector<8x32xf32>
    %c0_2 = arith.constant 0 : index
    %c0_3 = arith.constant 0 : index
    %2 = vector.load %arg3[%c0_2, %c0_3] : memref<1x32xf32, #tpu.memory_space<vmem>>, vector<1x32xf32>
    %c0_4 = arith.constant 0 : index
    %c0_5 = arith.constant 0 : index
    %3 = vector.load %arg4[%c0_4, %c0_5] : memref<1x32xf32, #tpu.memory_space<vmem>>, vector<1x32xf32>
    %cst = arith.constant dense<0.000000e+00> : vector<8xf32>
    %4 = vector.multi_reduction <add>, %1, %cst [1] : vector<8x32xf32> to vector<8xf32>
    %5 = vector.shape_cast %4 : vector<8xf32> to vector<8x1xf32>
    %cst_6 = arith.constant 3.200000e+01 : f32
    %6 = vector.broadcast %cst_6 : f32 to vector<8x1xf32>
    %7 = arith.divf %5, %6 : vector<8x1xf32>
    %8 = vector.broadcast %7 : vector<8x1xf32> to vector<8x32xf32>
    %9 = arith.subf %1, %8 : vector<8x32xf32>
    %10 = arith.mulf %9, %9 : vector<8x32xf32>
    %cst_7 = arith.constant dense<0.000000e+00> : vector<8xf32>
    %11 = vector.multi_reduction <add>, %10, %cst_7 [1] : vector<8x32xf32> to vector<8xf32>
    %12 = vector.shape_cast %11 : vector<8xf32> to vector<8x1xf32>
    %cst_8 = arith.constant 3.200000e+01 : f32
    %13 = vector.broadcast %cst_8 : f32 to vector<8x1xf32>
    %14 = arith.divf %12, %13 : vector<8x1xf32>
    %cst_9 = arith.constant 9.99999974E-6 : f32
    %15 = vector.broadcast %cst_9 : f32 to vector<8x1xf32>
    %16 = arith.addf %14, %15 : vector<8x1xf32>
    %17 = math.rsqrt %16 : vector<8x1xf32>
    %18 = vector.broadcast %17 : vector<8x1xf32> to vector<8x32xf32>
    %19 = arith.mulf %9, %18 : vector<8x32xf32>
    %20 = vector.broadcast %2 : vector<1x32xf32> to vector<8x32xf32>
    %21 = arith.mulf %19, %20 : vector<8x32xf32>
    %22 = vector.broadcast %3 : vector<1x32xf32> to vector<8x32xf32>
    %23 = arith.addf %21, %22 : vector<8x32xf32>
    %24 = arith.truncf %23 : vector<8x32xf32> to vector<8x32xbf16>
    %c0_10 = arith.constant 0 : index
    %c0_11 = arith.constant 0 : index
    %25 = vector.load %arg5[%c0_10, %c0_11] : memref<32x96xbf16, #tpu.memory_space<vmem>>, vector<32x96xbf16>
    %cst_12 = arith.constant dense<0.000000e+00> : vector<8x96xf32>
    %26 = tpu.matmul %24, %25, %cst_12 {dimension_numbers = #tpu.dot_dimension_numbers<[1], [0], [0], [1], [0, 0, 1, 1], [], []>} : vector<8x32xbf16>, vector<32x96xbf16>, vector<8x96xf32> -> vector<8x96xf32>
    %27 = vector.extract_strided_slice %26 {offsets = [0, 0], sizes = [8, 8], strides = [1, 1]} : vector<8x96xf32> to vector<8x8xf32>
    %28 = arith.truncf %27 : vector<8x8xf32> to vector<8x8xbf16>
    %c0_13 = arith.constant 0 : index
    %c0_14 = arith.constant 0 : index
    %c0_15 = arith.constant 0 : index
    %c0_16 = arith.constant 0 : index
    %29 = vector.load %arg6[%c0_13, %c0_14, %c0_15, %c0_16] : memref<1x4x8x8xbf16, #tpu.memory_space<vmem>>, vector<1x1x8x8xbf16>
    %30 = vector.shape_cast %29 : vector<1x1x8x8xbf16> to vector<8x8xbf16>
    %31 = vector.shape_cast %28 : vector<8x8xbf16> to vector<1x1x8x8xbf16>
    tpu.vector_store %arg6[%c0_13, %c0_14, %c0_15, %c0_16], %31 {strides = array<i32>} : memref<1x4x8x8xbf16, #tpu.memory_space<vmem>>, vector<1x1x8x8xbf16>,
    %32 = vector.extract_strided_slice %26 {offsets = [0, 32], sizes = [8, 8], strides = [1, 1]} : vector<8x96xf32> to vector<8x8xf32>
    %33 = arith.truncf %32 : vector<8x8xf32> to vector<8x8xbf16>
    %c0_17 = arith.constant 0 : index
    %c0_18 = arith.constant 0 : index
    %c0_19 = arith.constant 0 : index
    %c0_20 = arith.constant 0 : index
    %34 = vector.load %arg7[%c0_17, %c0_18, %c0_19, %c0_20] : memref<1x4x8x8xbf16, #tpu.memory_space<vmem>>, vector<1x1x8x8xbf16>
    %35 = vector.shape_cast %34 : vector<1x1x8x8xbf16> to vector<8x8xbf16>
    %36 = vector.shape_cast %33 : vector<8x8xbf16> to vector<1x1x8x8xbf16>
    tpu.vector_store %arg7[%c0_17, %c0_18, %c0_19, %c0_20], %36 {strides = array<i32>} : memref<1x4x8x8xbf16, #tpu.memory_space<vmem>>, vector<1x1x8x8xbf16>,
    %37 = vector.extract_strided_slice %26 {offsets = [0, 64], sizes = [8, 8], strides = [1, 1]} : vector<8x96xf32> to vector<8x8xf32>
    %38 = arith.truncf %37 : vector<8x8xf32> to vector<8x8xbf16>
    %c0_21 = arith.constant 0 : index
    %c0_22 = arith.constant 0 : index
    %c0_23 = arith.constant 0 : index
    %c0_24 = arith.constant 0 : index
    %39 = vector.load %arg8[%c0_21, %c0_22, %c0_23, %c0_24] : memref<1x4x8x8xbf16, #tpu.memory_space<vmem>>, vector<1x1x8x8xbf16>
    %40 = vector.shape_cast %39 : vector<1x1x8x8xbf16> to vector<8x8xbf16>
    %41 = vector.shape_cast %38 : vector<8x8xbf16> to vector<1x1x8x8xbf16>
    tpu.vector_store %arg8[%c0_21, %c0_22, %c0_23, %c0_24], %41 {strides = array<i32>} : memref<1x4x8x8xbf16, #tpu.memory_space<vmem>>, vector<1x1x8x8xbf16>,
    %42 = vector.extract_strided_slice %26 {offsets = [0, 8], sizes = [8, 8], strides = [1, 1]} : vector<8x96xf32> to vector<8x8xf32>
    %43 = arith.truncf %42 : vector<8x8xf32> to vector<8x8xbf16>
    %c0_25 = arith.constant 0 : index
    %c1 = arith.constant 1 : index
    %c0_26 = arith.constant 0 : index
    %c0_27 = arith.constant 0 : index
    %44 = vector.load %arg6[%c0_25, %c1, %c0_26, %c0_27] : memref<1x4x8x8xbf16, #tpu.memory_space<vmem>>, vector<1x1x8x8xbf16>
    %45 = vector.shape_cast %44 : vector<1x1x8x8xbf16> to vector<8x8xbf16>
    %46 = vector.shape_cast %43 : vector<8x8xbf16> to vector<1x1x8x8xbf16>
    tpu.vector_store %arg6[%c0_25, %c1, %c0_26, %c0_27], %46 {strides = array<i32>} : memref<1x4x8x8xbf16, #tpu.memory_space<vmem>>, vector<1x1x8x8xbf16>,
    %47 = vector.extract_strided_slice %26 {offsets = [0, 40], sizes = [8, 8], strides = [1, 1]} : vector<8x96xf32> to vector<8x8xf32>
    %48 = arith.truncf %47 : vector<8x8xf32> to vector<8x8xbf16>
    %c0_28 = arith.constant 0 : index
    %c1_29 = arith.constant 1 : index
    %c0_30 = arith.constant 0 : index
    %c0_31 = arith.constant 0 : index
    %49 = vector.load %arg7[%c0_28, %c1_29, %c0_30, %c0_31] : memref<1x4x8x8xbf16, #tpu.memory_space<vmem>>, vector<1x1x8x8xbf16>
    %50 = vector.shape_cast %49 : vector<1x1x8x8xbf16> to vector<8x8xbf16>
    %51 = vector.shape_cast %48 : vector<8x8xbf16> to vector<1x1x8x8xbf16>
    tpu.vector_store %arg7[%c0_28, %c1_29, %c0_30, %c0_31], %51 {strides = array<i32>} : memref<1x4x8x8xbf16, #tpu.memory_space<vmem>>, vector<1x1x8x8xbf16>,
    %52 = vector.extract_strided_slice %26 {offsets = [0, 72], sizes = [8, 8], strides = [1, 1]} : vector<8x96xf32> to vector<8x8xf32>
    %53 = arith.truncf %52 : vector<8x8xf32> to vector<8x8xbf16>
    %c0_32 = arith.constant 0 : index
    %c1_33 = arith.constant 1 : index
    %c0_34 = arith.constant 0 : index
    %c0_35 = arith.constant 0 : index
    %54 = vector.load %arg8[%c0_32, %c1_33, %c0_34, %c0_35] : memref<1x4x8x8xbf16, #tpu.memory_space<vmem>>, vector<1x1x8x8xbf16>
    %55 = vector.shape_cast %54 : vector<1x1x8x8xbf16> to vector<8x8xbf16>
    %56 = vector.shape_cast %53 : vector<8x8xbf16> to vector<1x1x8x8xbf16>
    tpu.vector_store %arg8[%c0_32, %c1_33, %c0_34, %c0_35], %56 {strides = array<i32>} : memref<1x4x8x8xbf16, #tpu.memory_space<vmem>>, vector<1x1x8x8xbf16>,
    %57 = vector.extract_strided_slice %26 {offsets = [0, 16], sizes = [8, 8], strides = [1, 1]} : vector<8x96xf32> to vector<8x8xf32>
    %58 = arith.truncf %57 : vector<8x8xf32> to vector<8x8xbf16>
    %c0_36 = arith.constant 0 : index
    %c2 = arith.constant 2 : index
    %c0_37 = arith.constant 0 : index
    %c0_38 = arith.constant 0 : index
    %59 = vector.load %arg6[%c0_36, %c2, %c0_37, %c0_38] : memref<1x4x8x8xbf16, #tpu.memory_space<vmem>>, vector<1x1x8x8xbf16>
    %60 = vector.shape_cast %59 : vector<1x1x8x8xbf16> to vector<8x8xbf16>
    %61 = vector.shape_cast %58 : vector<8x8xbf16> to vector<1x1x8x8xbf16>
    tpu.vector_store %arg6[%c0_36, %c2, %c0_37, %c0_38], %61 {strides = array<i32>} : memref<1x4x8x8xbf16, #tpu.memory_space<vmem>>, vector<1x1x8x8xbf16>,
    %62 = vector.extract_strided_slice %26 {offsets = [0, 48], sizes = [8, 8], strides = [1, 1]} : vector<8x96xf32> to vector<8x8xf32>
    %63 = arith.truncf %62 : vector<8x8xf32> to vector<8x8xbf16>
    %c0_39 = arith.constant 0 : index
    %c2_40 = arith.constant 2 : index
    %c0_41 = arith.constant 0 : index
    %c0_42 = arith.constant 0 : index
    %64 = vector.load %arg7[%c0_39, %c2_40, %c0_41, %c0_42] : memref<1x4x8x8xbf16, #tpu.memory_space<vmem>>, vector<1x1x8x8xbf16>
    %65 = vector.shape_cast %64 : vector<1x1x8x8xbf16> to vector<8x8xbf16>
    %66 = vector.shape_cast %63 : vector<8x8xbf16> to vector<1x1x8x8xbf16>
    tpu.vector_store %arg7[%c0_39, %c2_40, %c0_41, %c0_42], %66 {strides = array<i32>} : memref<1x4x8x8xbf16, #tpu.memory_space<vmem>>, vector<1x1x8x8xbf16>,
    %67 = vector.extract_strided_slice %26 {offsets = [0, 80], sizes = [8, 8], strides = [1, 1]} : vector<8x96xf32> to vector<8x8xf32>
    %68 = arith.truncf %67 : vector<8x8xf32> to vector<8x8xbf16>
    %c0_43 = arith.constant 0 : index
    %c2_44 = arith.constant 2 : index
    %c0_45 = arith.constant 0 : index
    %c0_46 = arith.constant 0 : index
    %69 = vector.load %arg8[%c0_43, %c2_44, %c0_45, %c0_46] : memref<1x4x8x8xbf16, #tpu.memory_space<vmem>>, vector<1x1x8x8xbf16>
    %70 = vector.shape_cast %69 : vector<1x1x8x8xbf16> to vector<8x8xbf16>
    %71 = vector.shape_cast %68 : vector<8x8xbf16> to vector<1x1x8x8xbf16>
    tpu.vector_store %arg8[%c0_43, %c2_44, %c0_45, %c0_46], %71 {strides = array<i32>} : memref<1x4x8x8xbf16, #tpu.memory_space<vmem>>, vector<1x1x8x8xbf16>,
    %72 = vector.extract_strided_slice %26 {offsets = [0, 24], sizes = [8, 8], strides = [1, 1]} : vector<8x96xf32> to vector<8x8xf32>
    %73 = arith.truncf %72 : vector<8x8xf32> to vector<8x8xbf16>
    %c0_47 = arith.constant 0 : index
    %c3 = arith.constant 3 : index
    %c0_48 = arith.constant 0 : index
    %c0_49 = arith.constant 0 : index
    %74 = vector.load %arg6[%c0_47, %c3, %c0_48, %c0_49] : memref<1x4x8x8xbf16, #tpu.memory_space<vmem>>, vector<1x1x8x8xbf16>
    %75 = vector.shape_cast %74 : vector<1x1x8x8xbf16> to vector<8x8xbf16>
    %76 = vector.shape_cast %73 : vector<8x8xbf16> to vector<1x1x8x8xbf16>
    tpu.vector_store %arg6[%c0_47, %c3, %c0_48, %c0_49], %76 {strides = array<i32>} : memref<1x4x8x8xbf16, #tpu.memory_space<vmem>>, vector<1x1x8x8xbf16>,
    %77 = vector.extract_strided_slice %26 {offsets = [0, 56], sizes = [8, 8], strides = [1, 1]} : vector<8x96xf32> to vector<8x8xf32>
    %78 = arith.truncf %77 : vector<8x8xf32> to vector<8x8xbf16>
    %c0_50 = arith.constant 0 : index
    %c3_51 = arith.constant 3 : index
    %c0_52 = arith.constant 0 : index
    %c0_53 = arith.constant 0 : index
    %79 = vector.load %arg7[%c0_50, %c3_51, %c0_52, %c0_53] : memref<1x4x8x8xbf16, #tpu.memory_space<vmem>>, vector<1x1x8x8xbf16>
    %80 = vector.shape_cast %79 : vector<1x1x8x8xbf16> to vector<8x8xbf16>
    %81 = vector.shape_cast %78 : vector<8x8xbf16> to vector<1x1x8x8xbf16>
    tpu.vector_store %arg7[%c0_50, %c3_51, %c0_52, %c0_53], %81 {strides = array<i32>} : memref<1x4x8x8xbf16, #tpu.memory_space<vmem>>, vector<1x1x8x8xbf16>,
    %82 = vector.extract_strided_slice %26 {offsets = [0, 88], sizes = [8, 8], strides = [1, 1]} : vector<8x96xf32> to vector<8x8xf32>
    %83 = arith.truncf %82 : vector<8x8xf32> to vector<8x8xbf16>
    %c0_54 = arith.constant 0 : index
    %c3_55 = arith.constant 3 : index
    %c0_56 = arith.constant 0 : index
    %c0_57 = arith.constant 0 : index
    %84 = vector.load %arg8[%c0_54, %c3_55, %c0_56, %c0_57] : memref<1x4x8x8xbf16, #tpu.memory_space<vmem>>, vector<1x1x8x8xbf16>
    %85 = vector.shape_cast %84 : vector<1x1x8x8xbf16> to vector<8x8xbf16>
    %86 = vector.shape_cast %83 : vector<8x8xbf16> to vector<1x1x8x8xbf16>
    tpu.vector_store %arg8[%c0_54, %c3_55, %c0_56, %c0_57], %86 {strides = array<i32>} : memref<1x4x8x8xbf16, #tpu.memory_space<vmem>>, vector<1x1x8x8xbf16>,
    return
  }
  func.func @transform_0(%arg0: i32, %arg1: i32) -> (i32, i32, i32) {
    %c0_i32 = arith.constant 0 : i32
    %c0_i32_0 = arith.constant 0 : i32
    return %arg1, %arg0, %c0_i32 : i32, i32, i32
  }
  func.func @transform_1(%arg0: i32, %arg1: i32) -> (i32, i32) {
    %c0_i32 = arith.constant 0 : i32
    %c0_i32_0 = arith.constant 0 : i32
    %c0_i32_1 = arith.constant 0 : i32
    return %c0_i32, %c0_i32_0 : i32, i32
  }
  func.func @transform_2(%arg0: i32, %arg1: i32) -> (i32, i32) {
    %c0_i32 = arith.constant 0 : i32
    %c0_i32_0 = arith.constant 0 : i32
    %c0_i32_1 = arith.constant 0 : i32
    return %c0_i32, %c0_i32_0 : i32, i32
  }
  func.func @transform_3(%arg0: i32, %arg1: i32) -> (i32, i32) {
    %c0_i32 = arith.constant 0 : i32
    %c0_i32_0 = arith.constant 0 : i32
    %c0_i32_1 = arith.constant 0 : i32
    return %c0_i32, %c0_i32_0 : i32, i32
  }
  func.func @transform_4(%arg0: i32, %arg1: i32) -> (i32, i32, i32, i32) {
    %c0_i32 = arith.constant 0 : i32
    %c0_i32_0 = arith.constant 0 : i32
    %c0_i32_1 = arith.constant 0 : i32
    return %arg1, %c0_i32, %arg0, %c0_i32_0 : i32, i32, i32, i32
  }
  func.func @transform_5(%arg0: i32, %arg1: i32) -> (i32, i32, i32, i32) {
    %c0_i32 = arith.constant 0 : i32
    %c0_i32_0 = arith.constant 0 : i32
    %c0_i32_1 = arith.constant 0 : i32
    return %arg1, %c0_i32, %arg0, %c0_i32_0 : i32, i32, i32, i32
  }
  func.func @transform_6(%arg0: i32, %arg1: i32) -> (i32, i32, i32, i32) {
    %c0_i32 = arith.constant 0 : i32
    %c0_i32_0 = arith.constant 0 : i32
    %c0_i32_1 = arith.constant 0 : i32
    return %arg1, %c0_i32, %arg0, %c0_i32_0 : i32, i32, i32, i32
  }
}

</mosaic_0001>

<llo_original>
// kernel: tpu_custom_call.1
$region0: #{tpu_custom_call.1}
  #allocation0 [shape = 'u32[]', space=smem, size = 0x4, offset = 0x4, fixed_abs, tag = 'smem constant byte address 0x4 - core index']
  #allocation1 [shape = 'u32[72,128]{1,0:T(1,128)}', space=vmem, size = 0x9000, scoped, tag = 'internal scratch']
  %s0 = inlined_call_operand.hbm [shape: f32[2,8,32], index: 0, kind: input, shape index: {}]
  %s1 = inlined_call_operand.hbm [shape: f32[1,32], index: 1, kind: input, shape index: {}]
  %s2 = inlined_call_operand.vmem [shape: f32[1,32], index: 2, kind: input, shape index: {}]
  %s3 = inlined_call_operand.hbm [shape: bf16[32,96], index: 3, kind: input, shape index: {}]
  %s4 = inlined_call_operand.hbm [shape: bf16[2,4,8,8], index: 4, kind: output, shape index: {0}]
  %s5 = inlined_call_operand.hbm [shape: bf16[2,4,8,8], index: 5, kind: output, shape index: {1}]
  %s6 = inlined_call_operand.hbm [shape: bf16[2,4,8,8], index: 6, kind: output, shape index: {2}]
  %7 = xla_tuple %s4, %s5, %s6
  %s8 = sld [smem:[#allocation0]]
  $region77: #{tpu_custom_call.1} parent=0
    _
  %s10 = ssub.s32 1, %s8
  %s11 = scalar_select 0, %s10, %s8
  $region1: #{tpu_custom_call.1} parent=0
    #allocation2 [shape = 'u8[8192]{0}', space=vmem, size = 0x2000, scoped, tag = 'input window, operand 0']
    #allocation3 [shape = 's32[2]{0}', space=sflag, size = 0x8, scoped, tag = 'scoped memory for tpu_custom_call.1']
    #allocation4 [shape = 's32[2]{0}', space=sflag, size = 0x8, scoped, tag = 'scoped memory for tpu_custom_call.1']
    #allocation5 [shape = 'u8[512]{0}', space=vmem, size = 0x400, scoped, tag = 'input window, operand 1, single buffered']
    #allocation6 [shape = 's32[1]{0}', space=sflag, size = 0x4, scoped, tag = 'scoped memory for tpu_custom_call.1']
    #allocation7 [shape = 'u8[8192]{0}', space=vmem, size = 0x2000, scoped, tag = 'input window, operand 3, single buffered']
    #allocation8 [shape = 'u8[16384]{0}', space=vmem, size = 0x4000, scoped, tag = 'output window, operand 0']
    #allocation9 [shape = 'u8[16384]{0}', space=vmem, size = 0x4000, scoped, tag = 'output window, operand 1']
    #allocation10 [shape = 's32[2]{0}', space=sflag, size = 0x8, scoped, tag = 'scoped memory for tpu_custom_call.1']
    #allocation11 [shape = 'u8[16384]{0}', space=vmem, size = 0x4000, scoped, tag = 'output window, operand 2']
    %12 = vsyncpa [#allocation3], 0
    %s13 = scalar_lea.sflag [#allocation3], 1
    %14 = vsyncpa %s13, 0
    %15 = vsyncpa [#allocation6], 0
    %16 = vsyncpa [#allocation4], 0
    %s17 = scalar_lea.sflag [#allocation4], 1
    %18 = vsyncpa %s17, 0
    %19 = vsyncpa [#allocation10], 0
    %s20 = scalar_lea.sflag [#allocation10], 1
    %21 = vsyncpa %s20, 0
    loop: start=0, step=1, limit=4
    $region2: #{tpu_custom_call.1} parent=1 // loop_pre_header
      _
    $region3: #{tpu_custom_call.1} parent=1 // loop_header
      %s23 = sphi 0, %s27
      %p24 = scmp.ge.s32.totalorder %s23, 4
      %s30 = sphi 0, %s42
      %s31 = sphi 0, %s38
      %s32 = sphi 0, %s30
      %s33 = sphi 0, %s31
      %s34 = sphi 0, %s32
      %s35 = sphi 0, %s33
      %s47 = sphi 0, %s49
      %s50 = sphi 0, %s47
      %s51 = sphi 0, %s50
      %s67 = sphi 0, %s51
      %s71 = sphi 0, %s71
      %s73 = sphi 0, %s71
      %s74 = sphi 0, %s73
      %s88 = sphi 0, %s74
      %s92 = sphi 0, %s92
      %s94 = sphi 0, %s92
      %s95 = sphi 0, %s94
      %s109 = sphi 0, %s95
      %s113 = sphi 0, %s113
      %s115 = sphi 0, %s113
      %s116 = sphi 0, %s115
      %s130 = sphi 0, %s116
      %s138 = sphi 0, %s140
      %s141 = sphi 0, %s138
      %s142 = sphi 0, %s141
      %s158 = sphi 0, %s142
      %s166 = sphi 0, %s168
      %s169 = sphi 0, %s166
      %s170 = sphi 0, %s169
      %s186 = sphi 0, %s170
      %s194 = sphi 0, %s196
      %s197 = sphi 0, %s194
      %s198 = sphi 0, %s197
      %s214 = sphi 0, %s198
    $region4: #{tpu_custom_call.1} parent=1 // loop_header_branch
      %26 = sbr.rel (%p24) target = $region8
    $region5: #{tpu_custom_call.1} parent=1 // loop_body
      %s28 = ssub.s32 %s23, 1
      %s29 = ssub.s32 %s23, 2
      %s36 = sadd.s32 1, %s31
      %p37 = scmp.ge.s32.totalorder %s36, 2
      %s38 = scalar_select %p37, 0, %s36
      %s39 = sadd.s32 1, %s30
      %s40 = scalar_select %p37, %s39, %s30
      %p41 = scmp.ge.s32.totalorder %s40, 1
      %s42 = scalar_select %p41, 0, %s40
      %s43 = ssub.s32 %s31, %s38
      %s44 = ssub.s32 %s30, %s42
      %s45 = sor.u32 %s43, %s44
      %p46 = scmp.eq.s32.totalorder %s45, 0
      %s48 = sadd.s32 %s47, 1
      %s49 = scalar_select %p46, %s47, %s48
      %p52 = pneg %p46
      %p53 = scmp.eq.s32.totalorder %s23, 1
      %p54 = por %p52, %p53
      %p55 = scmp.ne.s32.totalorder %s47, %s50
      %p56 = scmp.eq.s32.totalorder %s23, 0
      %p57 = por %p55, %p56
      %p58 = scmp.ne.s32.totalorder %s47, %s50
      %p59 = scmp.eq.s32.totalorder %s28, 1
      %p60 = por %p58, %p59
      %p61 = scmp.ne.s32.totalorder %s50, %s51
      %p62 = scmp.eq.s32.totalorder %s28, 0
      %p63 = por %p61, %p62
      %p64 = scmp.ne.s32.totalorder %s50, %s51
      %p65 = scmp.eq.s32.totalorder %s29, 1
      %p66 = por %p64, %p65
      %p68 = scmp.ne.s32.totalorder %s51, %s67
      %p69 = scmp.eq.s32.totalorder %s29, 0
      %p70 = por %p68, %p69
      %s72 = sadd.s32 %s71, 1
      %p75 = scmp.eq.s32.totalorder %s23, 1
      %p76 = scmp.ne.s32.totalorder %s71, %s73
      %p77 = scmp.eq.s32.totalorder %s23, 0
      %p78 = por %p76, %p77
      %p79 = scmp.ne.s32.totalorder %s71, %s73
      %p80 = scmp.eq.s32.totalorder %s28, 1
      %p81 = por %p79, %p80
      %p82 = scmp.ne.s32.totalorder %s73, %s74
      %p83 = scmp.eq.s32.totalorder %s28, 0
      %p84 = por %p82, %p83
      %p85 = scmp.ne.s32.totalorder %s73, %s74
      %p86 = scmp.eq.s32.totalorder %s29, 1
      %p87 = por %p85, %p86
      %p89 = scmp.ne.s32.totalorder %s74, %s88
      %p90 = scmp.eq.s32.totalorder %s29, 0
      %p91 = por %p89, %p90
      %s93 = sadd.s32 %s92, 1
      %p96 = scmp.eq.s32.totalorder %s23, 1
      %p97 = scmp.ne.s32.totalorder %s92, %s94
      %p98 = scmp.eq.s32.totalorder %s23, 0
      %p99 = por %p97, %p98
      %p100 = scmp.ne.s32.totalorder %s92, %s94
      %p101 = scmp.eq.s32.totalorder %s28, 1
      %p102 = por %p100, %p101
      %p103 = scmp.ne.s32.totalorder %s94, %s95
      %p104 = scmp.eq.s32.totalorder %s28, 0
      %p105 = por %p103, %p104
      %p106 = scmp.ne.s32.totalorder %s94, %s95
      %p107 = scmp.eq.s32.totalorder %s29, 1
      %p108 = por %p106, %p107
      %p110 = scmp.ne.s32.totalorder %s95, %s109
      %p111 = scmp.eq.s32.totalorder %s29, 0
      %p112 = por %p110, %p111
      %s114 = sadd.s32 %s113, 1
      %p117 = scmp.eq.s32.totalorder %s23, 1
      %p118 = scmp.ne.s32.totalorder %s113, %s115
      %p119 = scmp.eq.s32.totalorder %s23, 0
      %p120 = por %p118, %p119
      %p121 = scmp.ne.s32.totalorder %s113, %s115
      %p122 = scmp.eq.s32.totalorder %s28, 1
      %p123 = por %p121, %p122
      %p124 = scmp.ne.s32.totalorder %s115, %s116
      %p125 = scmp.eq.s32.totalorder %s28, 0
      %p126 = por %p124, %p125
      %p127 = scmp.ne.s32.totalorder %s115, %s116
      %p128 = scmp.eq.s32.totalorder %s29, 1
      %p129 = por %p127, %p128
      %p131 = scmp.ne.s32.totalorder %s116, %s130
      %p132 = scmp.eq.s32.totalorder %s29, 0
      %p133 = por %p131, %p132
      %s134 = ssub.s32 %s31, %s38
      %s135 = ssub.s32 %s30, %s42
      %s136 = sor.u32 %s134, %s135
      %p137 = scmp.eq.s32.totalorder %s136, 0
      %s139 = sadd.s32 %s138, 1
      %s140 = scalar_select %p137, %s138, %s139
      %p143 = pneg %p137
      %p144 = scmp.eq.s32.totalorder %s23, 1
      %p145 = por %p143, %p144
      %p146 = scmp.ne.s32.totalorder %s138, %s141
      %p147 = scmp.eq.s32.totalorder %s23, 0
      %p148 = por %p146, %p147
      %p149 = scmp.ne.s32.totalorder %s138, %s141
      %p150 = scmp.eq.s32.totalorder %s28, 1
      %p151 = por %p149, %p150
      %p152 = scmp.ne.s32.totalorder %s141, %s142
      %p153 = scmp.eq.s32.totalorder %s28, 0
      %p154 = por %p152, %p153
      %p155 = scmp.ne.s32.totalorder %s141, %s142
      %p156 = scmp.eq.s32.totalorder %s29, 1
      %p157 = por %p155, %p156
      %p159 = scmp.ne.s32.totalorder %s142, %s158
      %p160 = scmp.eq.s32.totalorder %s29, 0
      %p161 = por %p159, %p160
      %s162 = ssub.s32 %s31, %s38
      %s163 = ssub.s32 %s30, %s42
      %s164 = sor.u32 %s162, %s163
      %p165 = scmp.eq.s32.totalorder %s164, 0
      %s167 = sadd.s32 %s166, 1
      %s168 = scalar_select %p165, %s166, %s167
      %p171 = pneg %p165
      %p172 = scmp.eq.s32.totalorder %s23, 1
      %p173 = por %p171, %p172
      %p174 = scmp.ne.s32.totalorder %s166, %s169
      %p175 = scmp.eq.s32.totalorder %s23, 0
      %p176 = por %p174, %p175
      %p177 = scmp.ne.s32.totalorder %s166, %s169
      %p178 = scmp.eq.s32.totalorder %s28, 1
      %p179 = por %p177, %p178
      %p180 = scmp.ne.s32.totalorder %s169, %s170
      %p181 = scmp.eq.s32.totalorder %s28, 0
      %p182 = por %p180, %p181
      %p183 = scmp.ne.s32.totalorder %s169, %s170
      %p184 = scmp.eq.s32.totalorder %s29, 1
      %p185 = por %p183, %p184
      %p187 = scmp.ne.s32.totalorder %s170, %s186
      %p188 = scmp.eq.s32.totalorder %s29, 0
      %p189 = por %p187, %p188
      %s190 = ssub.s32 %s31, %s38
      %s191 = ssub.s32 %s30, %s42
      %s192 = sor.u32 %s190, %s191
      %p193 = scmp.eq.s32.totalorder %s192, 0
      %s195 = sadd.s32 %s194, 1
      %s196 = scalar_select %p193, %s194, %s195
      %p199 = pneg %p193
      %p200 = scmp.eq.s32.totalorder %s23, 1
      %p201 = por %p199, %p200
      %p202 = scmp.ne.s32.totalorder %s194, %s197
      %p203 = scmp.eq.s32.totalorder %s23, 0
      %p204 = por %p202, %p203
      %p205 = scmp.ne.s32.totalorder %s194, %s197
      %p206 = scmp.eq.s32.totalorder %s28, 1
      %p207 = por %p205, %p206
      %p208 = scmp.ne.s32.totalorder %s197, %s198
      %p209 = scmp.eq.s32.totalorder %s28, 0
      %p210 = por %p208, %p209
      %p211 = scmp.ne.s32.totalorder %s197, %s198
      %p212 = scmp.eq.s32.totalorder %s29, 1
      %p213 = por %p211, %p212
      %p215 = scmp.ne.s32.totalorder %s198, %s214
      %p216 = scmp.eq.s32.totalorder %s29, 0
      %p217 = por %p215, %p216
      %p218 = scmp.le.s32.totalorder 1, %s23
      %p219 = scmp.lt.s32.totalorder %s23, 3
      %p220 = pnand %p218, %p219
      %p221 = pneg %p220
      // Predicated region
      $region9: #{tpu_custom_call.1} parent=5 // pred_check
        _
      $region10: #{tpu_custom_call.1} parent=5 // pred_check_branch
        %223 = sbr.rel (%p220) target = $region12
      $region11: #{tpu_custom_call.1} parent=5 // pred_region
        %s224 = ssub.s32 %s23, 1
        // Predicated region
        $region13: #{tpu_custom_call.1} parent=11 // pred_check
          %p225 = pneg %p84
        $region14: #{tpu_custom_call.1} parent=11 // pred_check_branch
          %227 = sbr.rel (%p225) target = $region16
        $region15: #{tpu_custom_call.1} parent=11 // pred_region
          %229 = vsyncadd [#allocation6], 0
          %s231 = sshll.u32 %s1, 4
          %s232 = int_to_ptr.hbm [resolvable:$true] %s231
          %s233 = sshll.u32 [#allocation5], 4
          %s234 = int_to_ptr.vmem [resolvable:$true] %s233
          %236 = dma.hbm_to_vmem [thread:$0]  %s232, 16, %s234, [#allocation6]
        $region16: #{tpu_custom_call.1} parent=11 // pred_fallthru
          _
        // Predicated region
        $region17: #{tpu_custom_call.1} parent=11 // pred_check
          %p237 = pneg %p105
        $region18: #{tpu_custom_call.1} parent=11 // pred_check_branch
          %239 = sbr.rel (%p237) target = $region20
        $region19: #{tpu_custom_call.1} parent=11 // pred_region
          _
        $region20: #{tpu_custom_call.1} parent=11 // pred_fallthru
          _
        // Predicated region
        $region21: #{tpu_custom_call.1} parent=11 // pred_check
          %p240 = pneg %p126
        $region22: #{tpu_custom_call.1} parent=11 // pred_check_branch
          %242 = sbr.rel (%p240) target = $region24
        $region23: #{tpu_custom_call.1} parent=11 // pred_region
          %244 = vsyncadd [#allocation6], 0
          %s245 = sshll.u32 %s3, 4
          %s246 = int_to_ptr.hbm [resolvable:$true] %s245
          %s247 = sshll.u32 [#allocation7], 4
          %s248 = int_to_ptr.vmem [resolvable:$true] %s247
          %253 = dma.hbm_to_vmem [thread:$0]  %s246, 256, %s248, [#allocation6], 64, 64, 4
        $region24: #{tpu_custom_call.1} parent=11 // pred_fallthru
          _
      $region12: #{tpu_custom_call.1} parent=5 // pred_fallthru
        _
      %p254 = scmp.lt.s32.totalorder %s23, 2
      // Predicated region
      $region25: #{tpu_custom_call.1} parent=5 // pred_check
        %p255 = pneg %p254
      $region26: #{tpu_custom_call.1} parent=5 // pred_check_branch
        %257 = sbr.rel (%p255) target = $region28
      $region27: #{tpu_custom_call.1} parent=5 // pred_region
        // Predicated region
        $region29: #{tpu_custom_call.1} parent=27 // pred_check
          %p258 = pneg %p57
        $region30: #{tpu_custom_call.1} parent=27 // pred_check_branch
          %260 = sbr.rel (%p258) target = $region32
        $region31: #{tpu_custom_call.1} parent=27 // pred_region
          %s261 = sand.u32 %s47, 1
          %s262 = scalar_lea.sflag [#allocation3], %s261
          %s263 = sand.u32 %s47, 1
          %s264 = smul.addr %s263, 8
          %s265 = scalar_lea.vmem [#allocation2], %s264
          %267 = vsyncadd %s262, 0
          %s268 = sadd.s32 %s30, %s31
          %s269 = smul.addr %s268, 8
          %s270 = scalar_lea.hbm %s0, %s269
          %s272 = sshll.u32 %s270, 4
          %s273 = int_to_ptr.hbm [resolvable:$true] %s272
          %s274 = sshll.u32 %s265, 4
          %s275 = int_to_ptr.vmem [resolvable:$true] %s274
          %277 = dma.hbm_to_vmem [thread:$0]  %s273, 128, %s275, %s262
        $region32: #{tpu_custom_call.1} parent=27 // pred_fallthru
          _
      $region28: #{tpu_custom_call.1} parent=5 // pred_fallthru
        _
      %p278 = scmp.le.s32.totalorder 1, %s23
      %p279 = scmp.lt.s32.totalorder %s23, 3
      %p280 = pnand %p278, %p279
      %p281 = pneg %p280
      // Predicated region
      $region33: #{tpu_custom_call.1} parent=5 // pred_check
        _
      $region34: #{tpu_custom_call.1} parent=5 // pred_check_branch
        %283 = sbr.rel (%p280) target = $region36
      $region35: #{tpu_custom_call.1} parent=5 // pred_region
        %s284 = ssub.s32 %s23, 1
        %s285 = sand.u32 %s50, 1
        %s286 = scalar_lea.sflag [#allocation3], %s285
        %s287 = sand.u32 %s50, 1
        %s288 = smul.addr %s287, 8
        %s289 = scalar_lea.vmem [#allocation2], %s288
        // Predicated region
        $region37: #{tpu_custom_call.1} parent=35 // pred_check
          %p290 = pneg %p63
        $region38: #{tpu_custom_call.1} parent=35 // pred_check_branch
          %292 = sbr.rel (%p290) target = $region40
        $region39: #{tpu_custom_call.1} parent=35 // pred_region
          %294 = dma.done %s286, 128
        $region40: #{tpu_custom_call.1} parent=35 // pred_fallthru
          _
        // Predicated region
        $region41: #{tpu_custom_call.1} parent=35 // pred_check
          %p295 = pneg %p84
        $region42: #{tpu_custom_call.1} parent=35 // pred_check_branch
          %297 = sbr.rel (%p295) target = $region44
        $region43: #{tpu_custom_call.1} parent=35 // pred_region
          %299 = dma.done [#allocation6], 16
        $region44: #{tpu_custom_call.1} parent=35 // pred_fallthru
          _
        // Predicated region
        $region45: #{tpu_custom_call.1} parent=35 // pred_check
          %p300 = pneg %p126
        $region46: #{tpu_custom_call.1} parent=35 // pred_check_branch
          %302 = sbr.rel (%p300) target = $region48
        $region47: #{tpu_custom_call.1} parent=35 // pred_region
          %304 = dma.done [#allocation6], 256
        $region48: #{tpu_custom_call.1} parent=35 // pred_fallthru
          _
        %s305 = sand.u32 %s50, 1
        %s306 = scalar_lea.sflag [#allocation3], %s305
        %s307 = sand.u32 %s50, 1
        %s308 = smul.addr %s307, 8
        %s309 = scalar_lea.vmem [#allocation2], %s308
        %p310 = pneg %p63
        %p311 = pneg %p60
        %p312 = pneg %p84
        %p313 = pneg %p81
        %p314 = pneg %p105
        %p315 = pneg %p102
        %p316 = pneg %p126
        %p317 = pneg %p123
        %p318 = pneg %p154
        %p319 = pneg %p151
        %s320 = sand.u32 %s141, 1
        %s321 = scalar_lea.sflag [#allocation4], %s320
        %s322 = sand.u32 %s141, 1
        %s323 = smul.addr %s322, 16
        %s324 = scalar_lea.vmem [#allocation8], %s323
        %p325 = pneg %p182
        %p326 = pneg %p179
        %s327 = sand.u32 %s28, 1
        %s328 = scalar_lea.sflag [#allocation10], %s327
        %s329 = sand.u32 %s169, 1
        %s330 = smul.addr %s329, 16
        %s331 = scalar_lea.vmem [#allocation9], %s330
        %p332 = pneg %p210
        %p333 = pneg %p207
        %s334 = sand.u32 %s28, 1
        %s335 = scalar_lea.sflag [#allocation10], %s334
        %s336 = sand.u32 %s197, 1
        %s337 = smul.addr %s336, 16
        %s338 = scalar_lea.vmem [#allocation11], %s337
        %v340 = vld [vmem:[%s289] sm:$0xff]
        %v341 = vld [vmem:[#allocation5] sm:$0x1]
        %v342 = vld [vmem:[%s2] sm:$0x1]
        %vm343 = vcmask 261120
        %v344 = vsel %vm343, %v340, 0.0
        %345 = vadd.xlane.f32.xlu0 %v344
        %v346 = vpop.xlane.xlu0 %345
        %v347 = vrcp.pop 32.0
        %v348 = vmul.f32 32.0, %v347
        %v349 = vsub.f32 1.0, %v348
        %v350 = vmul.f32 %v347, %v349
        %v351 = vadd.f32 %v347, %v350
        %vm352 = vweird.f32 %v347
        %v353 = vsel %vm352, %v347, %v351
        %v354 = vmul.f32 %v346, %v353
        %v355 = vsub.f32 %v340, %v354
        %v356 = vmul.f32 %v355, %v355
        %v357 = vsel %vm343, %v356, 0.0
        %358 = vadd.xlane.f32.xlu0 %v357
        %v359 = vpop.xlane.xlu0 %358
        %v360 = vmul.f32 %v359, %v353
        %v361 = vadd.f32 %v360, 1e-05
        %v362 = vrsqrt.pop %v361
        %v363 = vmul.f32 %v362, %v361
        %v364 = vmul.f32 %v363, %v362
        %v365 = vmul.f32 0.5, %v364
        %v366 = vsub.f32 1.5, %v365
        %v367 = vmul.f32 %v362, %v366
        %vm368 = vweird.f32 %v361
        %vm369 = vweird.f32 %v362
        %vm370 = vmor %vm368, %vm369
        %v371 = vsel %vm370, %v362, %v367
        %v372 = vmul.f32 %v355, %v371
        %v374 = vperm.slane %v341, 0
        %v376 = vmul.f32 %v372, %v374
        %v378 = vperm.slane %v342, 0
        %v380 = vadd.f32 %v376, %v378
        %v381 = vpack.c.bf16 %v380, %v380
        %v382 = vld [vmem:[#allocation7] sm:$0xf]
        %v383 = vld [vmem:[#allocation7 + $0x4] sm:$0xf]
        %v384 = vld [vmem:[#allocation7 + $0x8] sm:$0xf]
        %v385 = vld [vmem:[#allocation7 + $0xc] sm:$0xf]
        %v390 = vunpack.c.l.b16 %v382
        %v391 = vunpack.c.l.b16 %v383
        %v392 = vunpack.c.l.b16 %v384
        %v393 = vunpack.c.l.b16 %v385
        %v394 = vpack.c.b16 %v391, %v390
        %v395 = vpack.c.b16 %v393, %v392
        %v399 = vsel %vm343, %v381, 0
        %401 = vmatpush.bf16.msra.mxu0 0
        %402 = vmatpush.bf16.msra.mxu0 0
        %403 = vmatpush.bf16.msra.mxu0 0
        %404 = vmatpush.bf16.msra.mxu0 0
        %405 = vmatpush.bf16.msra.mxu0 0
        %406 = vmatpush.bf16.msra.mxu0 0
        %407 = vmatpush.bf16.msra.mxu0 %v395
        %408 = vmatpush.bf16.msra.mxu0 %v394
        %409 = vmatmul.bf16.gmra.mxu0 %v399
        %v410 = vpop.f32.mrf.mxu0
        %v411 = vadd.f32 0.0, %v410
        %v412 = vpop.f32.mrf.mxu0
        %413 = vdwg.mxu0
        %v414 = vpack.c.bf16 %v411, %v411
        %vm415 = vcmask 60416
        %416 = vst.msk [vmem:[%s324] sm:$0xf] %vm415, %v414
        %418 = vrot.lane.b32.xlu0 %v414, 96
        %v419 = vpop.permute.xlu0 %418
        %421 = vst.msk [vmem:[%s331] sm:$0xf] %vm415, %v419
        %422 = vrot.lane.b32.xlu0 %v414, 64
        %v423 = vpop.permute.xlu0 %422
        %425 = vst.msk [vmem:[%s338] sm:$0xf] %vm415, %v423
        %426 = vrot.lane.b32.xlu0 %v414, 120
        %v427 = vpop.permute.xlu0 %426
        %s429 = scalar_lea.vmem %s324, 4 [#allocation8]
        %430 = vst.msk [vmem:[%s429] sm:$0xf] %vm415, %v427
        %431 = vrot.lane.b32.xlu0 %v414, 88
        %v432 = vpop.permute.xlu0 %431
        %s434 = scalar_lea.vmem %s331, 4 [#allocation9]
        %435 = vst.msk [vmem:[%s434] sm:$0xf] %vm415, %v432
        %436 = vrot.lane.b32.xlu0 %v414, 56
        %v437 = vpop.permute.xlu0 %436
        %s439 = scalar_lea.vmem %s338, 4 [#allocation11]
        %440 = vst.msk [vmem:[%s439] sm:$0xf] %vm415, %v437
        %441 = vrot.lane.b32.xlu0 %v414, 112
        %v442 = vpop.permute.xlu0 %441
        %s444 = scalar_lea.vmem %s324, 8 [#allocation8]
        %445 = vst.msk [vmem:[%s444] sm:$0xf] %vm415, %v442
        %446 = vrot.lane.b32.xlu0 %v414, 80
        %v447 = vpop.permute.xlu0 %446
        %s449 = scalar_lea.vmem %s331, 8 [#allocation9]
        %450 = vst.msk [vmem:[%s449] sm:$0xf] %vm415, %v447
        %451 = vrot.lane.b32.xlu0 %v414, 48
        %v452 = vpop.permute.xlu0 %451
        %s454 = scalar_lea.vmem %s338, 8 [#allocation11]
        %455 = vst.msk [vmem:[%s454] sm:$0xf] %vm415, %v452
        %456 = vrot.lane.b32.xlu0 %v414, 104
        %v457 = vpop.permute.xlu0 %456
        %s459 = scalar_lea.vmem %s324, 12 [#allocation8]
        %460 = vst.msk [vmem:[%s459] sm:$0xf] %vm415, %v457
        %461 = vrot.lane.b32.xlu0 %v414, 72
        %v462 = vpop.permute.xlu0 %461
        %s464 = scalar_lea.vmem %s331, 12 [#allocation9]
        %465 = vst.msk [vmem:[%s464] sm:$0xf] %vm415, %v462
        %466 = vrot.lane.b32.xlu0 %v414, 40
        %v467 = vpop.permute.xlu0 %466
        %s469 = scalar_lea.vmem %s338, 12 [#allocation11]
        %470 = vst.msk [vmem:[%s469] sm:$0xf] %vm415, %v467
        %s471 = sand.u32 %s141, 1
        %s472 = scalar_lea.sflag [#allocation4], %s471
        %s473 = sand.u32 %s141, 1
        %s474 = smul.addr %s473, 16
        %s475 = scalar_lea.vmem [#allocation8], %s474
        %s476 = sand.u32 %s28, 1
        %s477 = scalar_lea.sflag [#allocation10], %s476
        %s478 = sand.u32 %s169, 1
        %s479 = smul.addr %s478, 16
        %s480 = scalar_lea.vmem [#allocation9], %s479
        %s481 = sand.u32 %s28, 1
        %s482 = scalar_lea.sflag [#allocation10], %s481
        %s483 = sand.u32 %s197, 1
        %s484 = smul.addr %s483, 16
        %s485 = scalar_lea.vmem [#allocation11], %s484
        // Predicated region
        $region49: #{tpu_custom_call.1} parent=35 // pred_check
          %p486 = pneg %p151
        $region50: #{tpu_custom_call.1} parent=35 // pred_check_branch
          %488 = sbr.rel (%p486) target = $region52
        $region51: #{tpu_custom_call.1} parent=35 // pred_region
          %490 = vsyncadd %s472, 0
          %s491 = smul.addr %s33, 4
          %s492 = sadd.s32 %s32, %s491
          %s493 = smul.addr %s492, 4
          %s494 = scalar_lea.hbm %s4, %s493
          %s495 = sshll.u32 %s475, 4
          %s496 = int_to_ptr.vmem [resolvable:$true] %s495
          %s497 = sshll.u32 %s494, 4
          %s498 = int_to_ptr.hbm [resolvable:$true] %s497
          %503 = dma.vmem_to_hbm [thread:$0]  %s496, 256, %s498, %s472, 64, 64, 4
        $region52: #{tpu_custom_call.1} parent=35 // pred_fallthru
          _
        // Predicated region
        $region53: #{tpu_custom_call.1} parent=35 // pred_check
          %p504 = pneg %p179
        $region54: #{tpu_custom_call.1} parent=35 // pred_check_branch
          %506 = sbr.rel (%p504) target = $region56
        $region55: #{tpu_custom_call.1} parent=35 // pred_region
          %508 = vsyncadd %s477, 0
          %s509 = smul.addr %s33, 4
          %s510 = sadd.s32 %s32, %s509
          %s511 = smul.addr %s510, 4
          %s512 = scalar_lea.hbm %s5, %s511
          %s513 = sshll.u32 %s480, 4
          %s514 = int_to_ptr.vmem [resolvable:$true] %s513
          %s515 = sshll.u32 %s512, 4
          %s516 = int_to_ptr.hbm [resolvable:$true] %s515
          %521 = dma.vmem_to_hbm [thread:$0]  %s514, 256, %s516, %s477, 64, 64, 4
        $region56: #{tpu_custom_call.1} parent=35 // pred_fallthru
          _
        // Predicated region
        $region57: #{tpu_custom_call.1} parent=35 // pred_check
          %p522 = pneg %p207
        $region58: #{tpu_custom_call.1} parent=35 // pred_check_branch
          %524 = sbr.rel (%p522) target = $region60
        $region59: #{tpu_custom_call.1} parent=35 // pred_region
          %526 = vsyncadd %s482, 0
          %s527 = smul.addr %s33, 4
          %s528 = sadd.s32 %s32, %s527
          %s529 = smul.addr %s528, 4
          %s530 = scalar_lea.hbm %s6, %s529
          %s531 = sshll.u32 %s485, 4
          %s532 = int_to_ptr.vmem [resolvable:$true] %s531
          %s533 = sshll.u32 %s530, 4
          %s534 = int_to_ptr.hbm [resolvable:$true] %s533
          %539 = dma.vmem_to_hbm [thread:$0]  %s532, 256, %s534, %s482, 64, 64, 4
        $region60: #{tpu_custom_call.1} parent=35 // pred_fallthru
          _
      $region36: #{tpu_custom_call.1} parent=5 // pred_fallthru
        _
      %p540 = scmp.le.s32.totalorder 2, %s23
      // Predicated region
      $region61: #{tpu_custom_call.1} parent=5 // pred_check
        %p541 = pneg %p540
      $region62: #{tpu_custom_call.1} parent=5 // pred_check_branch
        %543 = sbr.rel (%p541) target = $region64
      $region63: #{tpu_custom_call.1} parent=5 // pred_region
        %s544 = ssub.s32 %s23, 2
        // Predicated region
        $region65: #{tpu_custom_call.1} parent=63 // pred_check
          %p545 = pneg %p157
        $region66: #{tpu_custom_call.1} parent=63 // pred_check_branch
          %547 = sbr.rel (%p545) target = $region68
        $region67: #{tpu_custom_call.1} parent=63 // pred_region
          %s548 = sand.u32 %s142, 1
          %s549 = scalar_lea.sflag [#allocation4], %s548
          %s550 = sand.u32 %s142, 1
          %s551 = smul.addr %s550, 16
          %s552 = scalar_lea.vmem [#allocation8], %s551
          %554 = dma.done %s549, 256
        $region68: #{tpu_custom_call.1} parent=63 // pred_fallthru
          _
        // Predicated region
        $region69: #{tpu_custom_call.1} parent=63 // pred_check
          %p555 = pneg %p185
        $region70: #{tpu_custom_call.1} parent=63 // pred_check_branch
          %557 = sbr.rel (%p555) target = $region72
        $region71: #{tpu_custom_call.1} parent=63 // pred_region
          %s558 = sand.u32 %s29, 1
          %s559 = scalar_lea.sflag [#allocation10], %s558
          %s560 = sand.u32 %s170, 1
          %s561 = smul.addr %s560, 16
          %s562 = scalar_lea.vmem [#allocation9], %s561
          %564 = dma.done %s559, 256
        $region72: #{tpu_custom_call.1} parent=63 // pred_fallthru
          _
        // Predicated region
        $region73: #{tpu_custom_call.1} parent=63 // pred_check
          %p565 = pneg %p213
        $region74: #{tpu_custom_call.1} parent=63 // pred_check_branch
          %567 = sbr.rel (%p565) target = $region76
        $region75: #{tpu_custom_call.1} parent=63 // pred_region
          %s568 = sand.u32 %s29, 1
          %s569 = scalar_lea.sflag [#allocation10], %s568
          %s570 = sand.u32 %s198, 1
          %s571 = smul.addr %s570, 16
          %s572 = scalar_lea.vmem [#allocation11], %s571
          %574 = dma.done %s569, 256
        $region76: #{tpu_custom_call.1} parent=63 // pred_fallthru
          _
      $region64: #{tpu_custom_call.1} parent=5 // pred_fallthru
        _
    $region6: #{tpu_custom_call.1} parent=1 // loop_footer
      %s27 = sadd.s32 1, %s23
    $region7: #{tpu_custom_call.1} parent=1 // loop_footer_branch
      %22 = sbr.rel target = $region3
    $region8: #{tpu_custom_call.1} parent=1 // loop_exit
      _
    %575 = vsyncpa [#allocation3], 1
    %s576 = scalar_lea.sflag [#allocation3], 1
    %577 = vsyncpa %s576, 1
    %578 = vsyncpa [#allocation6], 1
    %579 = vsyncpa [#allocation4], 1
    %s580 = scalar_lea.sflag [#allocation4], 1
    %581 = vsyncpa %s580, 1
    %582 = vsyncpa [#allocation10], 1
    %s583 = scalar_lea.sflag [#allocation10], 1
    %584 = vsyncpa %s583, 1

</llo_original>
